<compile_context>
chip_gen: v7x
topology: tpu7x:2x2x1
jax: 0.10.0
libtpu: 0.0.40
codegen_flags: <defaults>
</compile_context>

<pallas_src>
import functools

import jax
import jax.numpy as jnp
from jax.experimental import pallas as pl
from jax.experimental.pallas import tpu as pltpu

TOTAL_DIM = 7   # object_specs.total_dim: [scene_scale(1), rot(3), trans(3)]
LANES = 128     # lane width; padded vertex count is a multiple of this


def construct_da_object_pose():
    param_canonical = jnp.zeros((1, TOTAL_DIM), dtype=jnp.float32)
    param_canonical = param_canonical.at[0, 0].set(1.0)
    return param_canonical


def axis_angle_to_matrix(aa):
    """Rodrigues formula: (B, 3) axis-angle -> (B, 3, 3).  Tiny; plain-JAX glue."""
    aa = aa.astype(jnp.float32)
    theta2 = jnp.sum(aa * aa, axis=-1)
    small = theta2 < 1e-8
    safe_t2 = jnp.where(small, 1.0, theta2)      # where BEFORE sqrt: grad-safe at 0
    theta = jnp.sqrt(safe_t2)
    a = jnp.where(small, 1.0 - theta2 / 6.0, jnp.sin(theta) / theta)
    b = jnp.where(small, 0.5 - theta2 / 24.0, (1.0 - jnp.cos(theta)) / safe_t2)
    x, y, z = aa[:, 0], aa[:, 1], aa[:, 2]
    zeros = jnp.zeros_like(x)
    K = jnp.stack([zeros, -z, y,
                   z, zeros, -x,
                   -y, x, zeros], axis=-1).reshape(-1, 3, 3)
    eye = jnp.eye(3, dtype=jnp.float32)[None]
    return eye + a[:, None, None] * K + b[:, None, None] * jnp.matmul(K, K)


def _verts_kernel(rt_ref, vcano_ref, out_ref):
    """Posed vertices for the whole batch in one invocation.

    rt_ref    : (B, 12)      f32 SMEM  -- per batch, row-major flattened [scale*R | t] (3x4)
    vcano_ref : (3, n_pad)   f32 VMEM  -- canonical template, xyz on sublanes, lane-padded
    out_ref   : (B*3, n_pad) f32 VMEM  -- posed xyz rows, batch packed along sublanes
    """
    v = vcano_ref[...]                       # (3, n_pad)
    vx, vy, vz = v[0:1, :], v[1:2, :], v[2:3, :]
    n_batch = out_ref.shape[0] // 3
    for b in range(n_batch):                 # static unroll; B is tiny
        for i in range(3):
            # SMEM scalars broadcast for free in VPU vector-scalar ops.
            row = (rt_ref[b, 4 * i + 0] * vx
                   + rt_ref[b, 4 * i + 1] * vy
                   + rt_ref[b, 4 * i + 2] * vz
                   + rt_ref[b, 4 * i + 3])   # (1, n_pad)
            out_ref[pl.ds(3 * b + i, 1), :] = row


@functools.partial(jax.jit, static_argnames=("n_verts",))
def _object_forward(v_cano_t, scene_scale, trans, rot, *, n_verts):
    """Fused forward: Rodrigues + single-step Pallas rigid transform + 4x4 T."""
    B = rot.shape[0]
    n_pad = v_cano_t.shape[1]

    rot_mat = axis_angle_to_matrix(rot)                               # (B, 3, 3)
    trans_f = trans.reshape(B, 3).astype(jnp.float32)
    scale_f = scene_scale.reshape(B).astype(jnp.float32)

    # Fold scene_scale into R once: the same product feeds the kernel and T.
    # TODO(synk): HOLD's ObjectModel may keep scene_scale out of T's 3x3 block;
    # here T is the full canonical->posed map so T @ [v_cano; 1] == verts.
    sR = scale_f[:, None, None] * rot_mat                             # (B, 3, 3)
    rt = jnp.concatenate([sR, trans_f[:, :, None]], axis=2)          # (B, 3, 4)
    rt_flat = rt.reshape(B, 12)                                       # SMEM operand
    bottom = jnp.broadcast_to(
        jnp.array([0.0, 0.0, 0.0, 1.0], jnp.float32)[None, :], (B, 4))
    T = jnp.concatenate([rt_flat, bottom], axis=1).reshape(B, 4, 4)   # (B, 4, 4)

    out = pl.pallas_call(
        _verts_kernel,
        out_shape=jax.ShapeDtypeStruct((B * 3, n_pad), jnp.float32),
        in_specs=[
            pl.BlockSpec(memory_space=pltpu.MemorySpace.SMEM),        # rt_flat (B, 12)
            pl.BlockSpec(memory_space=pltpu.MemorySpace.VMEM),        # v_cano_t (3, n_pad)
        ],
        out_specs=pl.BlockSpec(memory_space=pltpu.MemorySpace.VMEM),
    )(rt_flat, v_cano_t)

    # Back to the PyTorch (B, N, 3) contract.  This is the lane-dense slab's
    # only consumer; padded lanes (which hold the translation) are sliced away.
    verts = jnp.transpose(out.reshape(B, 3, n_pad), (0, 2, 1))[:, :n_verts, :]
    return verts, T


class ObjectModel:
    """Synthetic stand-in for HOLD's ObjectModel (fixed canonical template mesh)."""

    def __init__(self, seq_name, template=None, num_verts=200, key=None):
        if key is None:
            key = jax.random.PRNGKey(42)
        # Deterministic synthetic template vertices (no .pt / mesh files loaded).
        self.v3d_cano = jax.random.uniform(
            key, (num_verts, 3), jnp.float32, minval=-0.5, maxval=0.5)
        self.num_verts = num_verts
        # Precomputed once: transposed + lane-padded canonical template (3, n_pad).
        n_pad = max(pl.cdiv(num_verts, LANES) * LANES, LANES)
        self.v_cano_t = (jnp.zeros((3, n_pad), jnp.float32)
                         .at[:, :num_verts].set(self.v3d_cano.T))

    def forward(self, rot, trans, scene_scale):
        verts, T = _object_forward(self.v_cano_t, scene_scale, trans, rot,
                                   n_verts=self.num_verts)
        return {'vertices': verts, 'T': T}


class ObjectServer:
    def __init__(self, seq_name="synthetic", template=None, num_verts=200):
        self.object_model = ObjectModel(seq_name, template, num_verts=num_verts,
                                        key=jax.random.PRNGKey(42))
        self.param_canonical = construct_da_object_pose()
        scene_scale = self.param_canonical[:, 0]
        rot = self.param_canonical[:, 1:4]
        trans = self.param_canonical[:, 4:4 + 3]
        # NOTE: replicates the upstream call-order quirk forward(scale, rot, trans)
        # and the upstream dead-store of verts_c.
        output = self.forward(scene_scale, rot, trans)
        self.verts_c = output['verts']
        self.verts_c = self.object_model.v3d_cano[None, :, :]

    def forward(self, scene_scale, transl, thetas, absolute=False):
        output = {}
        obj_output = self.object_model.forward(
            rot=thetas, trans=transl, scene_scale=scene_scale)
        output['verts'] = obj_output['vertices']
        output['obj_tfs'] = obj_output['T'][:, None, :, :]
        return output


if __name__ == "__main__":
    key = jax.random.PRNGKey(0)
    k1, k2, k3 = jax.random.split(key, 3)

    B = 2
    N = 200
    server = ObjectServer("synthetic", num_verts=N)

    scene_scale = jax.random.uniform(k1, (B,), jnp.float32, minval=0.5, maxval=1.5)
    transl = jax.random.normal(k2, (B, 3), jnp.float32) * 0.1
    thetas = jax.random.normal(k3, (B, 3), jnp.float32) * 0.5

    out = server.forward(scene_scale, transl, thetas)
    jax.block_until_ready(out['verts'])
    jax.block_until_ready(out['obj_tfs'])

    assert out['verts'].shape == (B, N, 3)
    assert out['obj_tfs'].shape == (B, 1, 4, 4)

    # Pure-JAX reference for the hot path.
    R = axis_angle_to_matrix(thetas)
    ref_verts = (scene_scale[:, None, None]
                 * jnp.einsum('bij,nj->bni', R, server.object_model.v3d_cano)
                 + transl[:, None, :])
    assert jnp.allclose(out['verts'], ref_verts, atol=1e-5), "verts mismatch"

    # T consistency: T @ [v_cano; 1] reproduces verts.
    v_h = jnp.concatenate(
        [server.object_model.v3d_cano,
         jnp.ones((N, 1), jnp.float32)], axis=1)                       # (N, 4)
    ref_from_T = jnp.einsum('bij,nj->bni', out['obj_tfs'][:, 0], v_h)[:, :, :3]
    assert jnp.allclose(out['verts'], ref_from_T, atol=1e-5), "T mismatch"

    # Canonical-pose sanity: identity transform reproduces the template.
    cano = server.forward(jnp.ones((1,), jnp.float32),
                          jnp.zeros((1, 3), jnp.float32),
                          jnp.zeros((1, 3), jnp.float32))
    assert jnp.allclose(cano['verts'], server.verts_c, atol=1e-6)

    print("KERNEL_OK")
</pallas_src>

<mosaic_0001>
module attributes {stable_mosaic.version = 11 : i64} {
  func.func @_verts_kernel(%arg0: memref<1x12xf32, #tpu.memory_space<smem>>, %arg1: memref<3x256xf32, #tpu.memory_space<vmem>>, %arg2: memref<3x256xf32, #tpu.memory_space<vmem>>) attributes {dimension_semantics = [], scalar_prefetch = 0 : i64, scratch_operands = 0 : i64, tpu.core_type = #tpu.core_type<tc>} {
    %c0 = arith.constant 0 : index
    %c0_0 = arith.constant 0 : index
    %0 = vector.load %arg1[%c0, %c0_0] : memref<3x256xf32, #tpu.memory_space<vmem>>, vector<3x256xf32>
    %1 = vector.extract_strided_slice %0 {offsets = [0, 0], sizes = [1, 256], strides = [1, 1]} : vector<3x256xf32> to vector<1x256xf32>
    %2 = vector.extract_strided_slice %0 {offsets = [1, 0], sizes = [1, 256], strides = [1, 1]} : vector<3x256xf32> to vector<1x256xf32>
    %3 = vector.extract_strided_slice %0 {offsets = [2, 0], sizes = [1, 256], strides = [1, 1]} : vector<3x256xf32> to vector<1x256xf32>
    %c0_1 = arith.constant 0 : index
    %c0_2 = arith.constant 0 : index
    %4 = memref.load %arg0[%c0_1, %c0_2] : memref<1x12xf32, #tpu.memory_space<smem>>
    %5 = vector.broadcast %4 : f32 to vector<1x256xf32>
    %6 = arith.mulf %5, %1 : vector<1x256xf32>
    %c0_3 = arith.constant 0 : index
    %c1 = arith.constant 1 : index
    %7 = memref.load %arg0[%c0_3, %c1] : memref<1x12xf32, #tpu.memory_space<smem>>
    %8 = vector.broadcast %7 : f32 to vector<1x256xf32>
    %9 = arith.mulf %8, %2 : vector<1x256xf32>
    %10 = arith.addf %6, %9 : vector<1x256xf32>
    %c0_4 = arith.constant 0 : index
    %c2 = arith.constant 2 : index
    %11 = memref.load %arg0[%c0_4, %c2] : memref<1x12xf32, #tpu.memory_space<smem>>
    %12 = vector.broadcast %11 : f32 to vector<1x256xf32>
    %13 = arith.mulf %12, %3 : vector<1x256xf32>
    %14 = arith.addf %10, %13 : vector<1x256xf32>
    %c0_5 = arith.constant 0 : index
    %c3 = arith.constant 3 : index
    %15 = memref.load %arg0[%c0_5, %c3] : memref<1x12xf32, #tpu.memory_space<smem>>
    %16 = vector.broadcast %15 : f32 to vector<1x256xf32>
    %17 = arith.addf %14, %16 : vector<1x256xf32>
    %c0_6 = arith.constant 0 : index
    %c0_7 = arith.constant 0 : index
    %18 = vector.load %arg2[%c0_6, %c0_7] : memref<3x256xf32, #tpu.memory_space<vmem>>, vector<1x256xf32>
    tpu.vector_store %arg2[%c0_6, %c0_7], %17 {strides = array<i32>} : memref<3x256xf32, #tpu.memory_space<vmem>>, vector<1x256xf32>,
    %c0_8 = arith.constant 0 : index
    %c4 = arith.constant 4 : index
    %19 = memref.load %arg0[%c0_8, %c4] : memref<1x12xf32, #tpu.memory_space<smem>>
    %20 = vector.broadcast %19 : f32 to vector<1x256xf32>
    %21 = arith.mulf %20, %1 : vector<1x256xf32>
    %c0_9 = arith.constant 0 : index
    %c5 = arith.constant 5 : index
    %22 = memref.load %arg0[%c0_9, %c5] : memref<1x12xf32, #tpu.memory_space<smem>>
    %23 = vector.broadcast %22 : f32 to vector<1x256xf32>
    %24 = arith.mulf %23, %2 : vector<1x256xf32>
    %25 = arith.addf %21, %24 : vector<1x256xf32>
    %c0_10 = arith.constant 0 : index
    %c6 = arith.constant 6 : index
    %26 = memref.load %arg0[%c0_10, %c6] : memref<1x12xf32, #tpu.memory_space<smem>>
    %27 = vector.broadcast %26 : f32 to vector<1x256xf32>
    %28 = arith.mulf %27, %3 : vector<1x256xf32>
    %29 = arith.addf %25, %28 : vector<1x256xf32>
    %c0_11 = arith.constant 0 : index
    %c7 = arith.constant 7 : index
    %30 = memref.load %arg0[%c0_11, %c7] : memref<1x12xf32, #tpu.memory_space<smem>>
    %31 = vector.broadcast %30 : f32 to vector<1x256xf32>
    %32 = arith.addf %29, %31 : vector<1x256xf32>
    %c1_12 = arith.constant 1 : index
    %c0_13 = arith.constant 0 : index
    %33 = vector.load %arg2[%c1_12, %c0_13] : memref<3x256xf32, #tpu.memory_space<vmem>>, vector<1x256xf32>
    tpu.vector_store %arg2[%c1_12, %c0_13], %32 {strides = array<i32>} : memref<3x256xf32, #tpu.memory_space<vmem>>, vector<1x256xf32>,
    %c0_14 = arith.constant 0 : index
    %c8 = arith.constant 8 : index
    %34 = memref.load %arg0[%c0_14, %c8] : memref<1x12xf32, #tpu.memory_space<smem>>
    %35 = vector.broadcast %34 : f32 to vector<1x256xf32>
    %36 = arith.mulf %35, %1 : vector<1x256xf32>
    %c0_15 = arith.constant 0 : index
    %c9 = arith.constant 9 : index
    %37 = memref.load %arg0[%c0_15, %c9] : memref<1x12xf32, #tpu.memory_space<smem>>
    %38 = vector.broadcast %37 : f32 to vector<1x256xf32>
    %39 = arith.mulf %38, %2 : vector<1x256xf32>
    %40 = arith.addf %36, %39 : vector<1x256xf32>
    %c0_16 = arith.constant 0 : index
    %c10 = arith.constant 10 : index
    %41 = memref.load %arg0[%c0_16, %c10] : memref<1x12xf32, #tpu.memory_space<smem>>
    %42 = vector.broadcast %41 : f32 to vector<1x256xf32>
    %43 = arith.mulf %42, %3 : vector<1x256xf32>
    %44 = arith.addf %40, %43 : vector<1x256xf32>
    %c0_17 = arith.constant 0 : index
    %c11 = arith.constant 11 : index
    %45 = memref.load %arg0[%c0_17, %c11] : memref<1x12xf32, #tpu.memory_space<smem>>
    %46 = vector.broadcast %45 : f32 to vector<1x256xf32>
    %47 = arith.addf %44, %46 : vector<1x256xf32>
    %c2_18 = arith.constant 2 : index
    %c0_19 = arith.constant 0 : index
    %48 = vector.load %arg2[%c2_18, %c0_19] : memref<3x256xf32, #tpu.memory_space<vmem>>, vector<1x256xf32>
    tpu.vector_store %arg2[%c2_18, %c0_19], %47 {strides = array<i32>} : memref<3x256xf32, #tpu.memory_space<vmem>>, vector<1x256xf32>,
    return
  }
}

</mosaic_0001>

<llo_original>
// kernel: _object_forward.1
$region0: #{_object_forward.1}
  #allocation0 [shape = 'u32[]', space=smem, size = 0x4, offset = 0x4, fixed_abs, tag = 'smem constant byte address 0x4 - core index']
  #allocation1 [shape = 'u32[144,128]{1,0:T(1,128)}', space=vmem, size = 0x12000, scoped, tag = 'internal scratch']
  %s0 = inlined_call_operand.vmem [shape: f32[1,12], index: 0, kind: input, shape index: {}]
  %s1 = inlined_call_operand.vmem [shape: f32[3,256], index: 1, kind: input, shape index: {}]
  %s2 = inlined_call_operand.vmem [shape: f32[3,256], index: 2, kind: output, shape index: {}]
  %s3 = sld [smem:[#allocation0]]
  $region22: #{_object_forward.1} parent=0
    _
  %s5 = ssub.s32 1, %s3
  %s6 = scalar_select 0, %s5, %s3
  $region1: #{_object_forward.1} parent=0
    #allocation2 [shape = 'u8[512]{0}', space=smem, size = 0x200, scoped, tag = 'input window, operand 0, single buffered']
    #allocation3 [shape = 's32[1]{0}', space=sflag, size = 0x4, scoped, tag = 'scoped memory for _object_forward.1']
    %7 = vsyncpa [#allocation3], 0
    // Predicated region
    $region2: #{_object_forward.1} parent=1 // pred_check
      _
    $region3: #{_object_forward.1} parent=1 // pred_check_branch
      %9 = sbr.rel (0) target = $region5
    $region4: #{_object_forward.1} parent=1 // pred_region
      %s11 = ssub.s32 16, 16
      %12 = vsyncadd [#allocation3], %s11
      %s14 = sshll.u32 %s0, 4
      %s15 = int_to_ptr.vmem [resolvable:$true] %s14
      %17 = dma.vmem_to_smem %s15, 16, [#allocation2], [#allocation3]
    $region5: #{_object_forward.1} parent=1 // pred_fallthru
      _
    // Predicated region
    $region6: #{_object_forward.1} parent=1 // pred_check
      _
    $region7: #{_object_forward.1} parent=1 // pred_check_branch
      %19 = sbr.rel (0) target = $region9
    $region8: #{_object_forward.1} parent=1 // pred_region
      _
    $region9: #{_object_forward.1} parent=1 // pred_fallthru
      _
    // Predicated region
    $region10: #{_object_forward.1} parent=1 // pred_check
      _
    $region11: #{_object_forward.1} parent=1 // pred_check_branch
      %21 = sbr.rel (0) target = $region13
    $region12: #{_object_forward.1} parent=1 // pred_region
      %22 = dma.done [#allocation3], 16
    $region13: #{_object_forward.1} parent=1 // pred_fallthru
      _
    %23 = sfence
    %v24 = vld [vmem:[%s1] sm:$0x77]
    %s25 = sld [smem:[#allocation2]]
    %v26 = vstv %s25
    %v27 = vmul.f32 %v26, %v24
    %s28 = sld [smem:[#allocation2 + $0x1]]
    %v29 = vstv %s28
    %v30 = vmul.f32 %v29, %v24
    %v32 = vrot.slane %v30, 5
    %v33 = vrot.slane %v32, 4
    %v35 = vadd.f32 %v27, %v33
    %s36 = sld [smem:[#allocation2 + $0x2]]
    %v37 = vstv %s36
    %v38 = vmul.f32 %v37, %v24
    %v40 = vrot.slane %v38, 6
    %v41 = vrot.slane %v40, 4
    %v43 = vadd.f32 %v35, %v41
    %s44 = sld [smem:[#allocation2 + $0x3]]
    %v45 = vstv %s44
    %v46 = vadd.f32 %v43, %v45
    %v49 = vunpack.c.l.s4 1966171168
    %v50 = vunpack.c.0.s8 %v49
    %v51 = vlaneseq
    %v52 = vshrl.u32 %v51, 7
    %v53 = vsub.s32 %v50, %v52
    %v54 = vrot.slane %v46, %v53
    %v56 = vunpack.c.l.s4 1966171168
    %v57 = vunpack.c.0.s8 %v56
    %v58 = vlaneseq
    %v59 = vshrl.u32 %v58, 7
    %v60 = vsub.s32 %v57, %v59
    %v61 = vrot.slane %v54, %v60
    %v63 = vlaneseq
    %vm64 = vcmp.ge.s32.totalorder %v63, 0
    %vm65 = vcmp.lt.s32.totalorder %v63, 256
    %vm66 = vmand %vm64, %vm65
    %67 = vst.msk [vmem:[%s2] ss:$4 sm:$0x3] %vm66, %v61
    %s68 = sld [smem:[#allocation2 + $0x4]]
    %v69 = vstv %s68
    %v70 = vmul.f32 %v69, %v24
    %s71 = sld [smem:[#allocation2 + $0x5]]
    %v72 = vstv %s71
    %v73 = vmul.f32 %v72, %v24
    %v75 = vrot.slane %v73, 5
    %v76 = vrot.slane %v75, 4
    %v78 = vadd.f32 %v70, %v76
    %s79 = sld [smem:[#allocation2 + $0x6]]
    %v80 = vstv %s79
    %v81 = vmul.f32 %v80, %v24
    %v83 = vrot.slane %v81, 6
    %v84 = vrot.slane %v83, 4
    %v86 = vadd.f32 %v78, %v84
    %s87 = sld [smem:[#allocation2 + $0x7]]
    %v88 = vstv %s87
    %v89 = vadd.f32 %v86, %v88
    %v92 = vunpack.c.l.s4 1966171168
    %v93 = vunpack.c.0.s8 %v92
    %v94 = vlaneseq
    %v95 = vshrl.u32 %v94, 7
    %v96 = vsub.s32 %v93, %v95
    %v97 = vrot.slane %v89, %v96
    %v99 = vunpack.c.l.s4 1966171168
    %v100 = vunpack.c.0.s8 %v99
    %v101 = vlaneseq
    %v102 = vshrl.u32 %v101, 7
    %v103 = vsub.s32 %v100, %v102
    %v104 = vrot.slane %v97, %v103
    %s106 = scalar_lea.vmem %s2, 1
    %107 = vst.msk [vmem:[%s106] ss:$4 sm:$0x3] %vm66, %v104
    %s108 = sld [smem:[#allocation2 + $0x8]]
    %v109 = vstv %s108
    %v110 = vmul.f32 %v109, %v24
    %s111 = sld [smem:[#allocation2 + $0x9]]
    %v112 = vstv %s111
    %v113 = vmul.f32 %v112, %v24
    %v115 = vrot.slane %v113, 5
    %v116 = vrot.slane %v115, 4
    %v118 = vadd.f32 %v110, %v116
    %s119 = sld [smem:[#allocation2 + $0xa]]
    %v120 = vstv %s119
    %v121 = vmul.f32 %v120, %v24
    %v123 = vrot.slane %v121, 6
    %v124 = vrot.slane %v123, 4
    %v126 = vadd.f32 %v118, %v124
    %s127 = sld [smem:[#allocation2 + $0xb]]
    %v128 = vstv %s127
    %v129 = vadd.f32 %v126, %v128
    %v132 = vunpack.c.l.s4 1966171168
    %v133 = vunpack.c.0.s8 %v132
    %v134 = vlaneseq
    %v135 = vshrl.u32 %v134, 7
    %v136 = vsub.s32 %v133, %v135
    %v137 = vrot.slane %v129, %v136
    %v139 = vunpack.c.l.s4 1966171168
    %v140 = vunpack.c.0.s8 %v139
    %v141 = vlaneseq
    %v142 = vshrl.u32 %v141, 7
    %v143 = vsub.s32 %v140, %v142
    %v144 = vrot.slane %v137, %v143
    %s146 = scalar_lea.vmem %s2, 2
    %147 = vst.msk [vmem:[%s146] ss:$4 sm:$0x3] %vm66, %v144
    // Predicated region
    $region14: #{_object_forward.1} parent=1 // pred_check
      _
    $region15: #{_object_forward.1} parent=1 // pred_check_branch
      %149 = sbr.rel (0) target = $region17
    $region16: #{_object_forward.1} parent=1 // pred_region
      _
    $region17: #{_object_forward.1} parent=1 // pred_fallthru
      _
    // Predicated region
    $region18: #{_object_forward.1} parent=1 // pred_check
      _
    $region19: #{_object_forward.1} parent=1 // pred_check_branch
      %151 = sbr.rel (0) target = $region21
    $region20: #{_object_forward.1} parent=1 // pred_region
      _
    $region21: #{_object_forward.1} parent=1 // pred_fallthru
      _
    %152 = vsyncpa [#allocation3], 1

</llo_original>
